<compile_context>
chip_gen: v7x
topology: tpu7x:2x2x1
jax: 0.10.0
libtpu: 0.0.40
codegen_flags: <defaults>
</compile_context>

<pallas_src>
import jax
import jax.numpy as jnp
from jax.experimental import pallas as pl
from jax.experimental.pallas import tpu as pltpu

# ---- synthetic config (replaces dataset_params.yaml) ----
FEATURES = 16                 # config[dataset]['Feature_No']
CLASS_NUM = 3                 # config[dataset]['Class_No']
K = 3                         # conv kernel size
C1, C2 = 5, 10                # encoder channel counts
L1 = FEATURES - 2             # length after Conv1d(1,5,3)
L2 = FEATURES - 4             # length after Conv1d(5,10,3)
EMBED_DIM = C2 * L2           # 10 * (features - 4) = 120
HIDDEN = 64
BN_EPS = 1e-5
LEAKY = 0.3

LANES = 128                   # all matmul N dims / stores padded to 128 lanes
H1_PAD = 128                  # padded C1*L1 (=70)
EMBED_PAD = 128               # padded EMBED_DIM (=120)
HID_PAD = 128                 # padded HIDDEN (=64)
ALIGN = 16                    # row-tile alignment (bf16 sublane packing)

# row offsets of each weight matrix inside the stacked (W_ROWS, 128) operand
W1_OFF = 0
W2_OFF = W1_OFF + FEATURES            # 16
WL1_OFF = W2_OFF + H1_PAD             # 144
WL2_OFF = WL1_OFF + EMBED_PAD         # 272
W_ROWS = WL2_OFF + HID_PAD            # 400


def _round_up(v, m):
    return ((v + m - 1) // m) * m


# ---------------- kernel ----------------

def _make_kernel(bt: int, sub: int):
    nsub = bt // sub
    assert nsub * sub == bt

    def conv_eeg_kernel(x_ref, w_ref, vec_ref, out_ref):
        # Zero-cost static views into the stacked weight operand (bf16).
        w1b = w_ref.at[W1_OFF:W1_OFF + FEATURES, :]
        w2b = w_ref.at[W2_OFF:W2_OFF + H1_PAD, :]
        wl1 = w_ref.at[WL1_OFF:WL1_OFF + EMBED_PAD, :]
        wl2 = w_ref.at[WL2_OFF:WL2_OFF + HID_PAD, :]
        # Packed (8,128) f32 lane vectors: fused BN scale/shift + linear biases.
        s1 = vec_ref[0:1, :]
        t1 = vec_ref[1:2, :]
        s2 = vec_ref[2:3, :]
        t2 = vec_ref[3:4, :]
        bl1 = vec_ref[4:5, :]
        bl2 = vec_ref[5:6, :]           # already shifted into cols 120..122

        def rows(r0):
            x = x_ref[pl.ds(r0, sub), :]                                    # (sub, F) bf16
            # conv1 (1->5, k=3, valid) + BN(eval) + LeakyReLU(0.3): one MXU matmul.
            h1 = jnp.dot(x, w1b[...], preferred_element_type=jnp.float32)
            h1 = h1 * s1 + t1
            h1 = jnp.where(h1 > 0, h1, LEAKY * h1)                          # pad cols stay 0
            # conv2 (5->10, k=3, valid) + BN(eval) + LeakyReLU(0.3).
            # Column ordering (d*L2 + m) matches nn.Flatten of (B, C2, L2).
            flat = jnp.dot(h1.astype(jnp.bfloat16), w2b[...],
                           preferred_element_type=jnp.float32)
            flat = flat * s2 + t2
            flat = jnp.where(flat > 0, flat, LEAKY * flat)                  # cols 120..127 == 0
            # classifier: Linear(120,64) -> ReLU -> Dropout(eval) -> Linear(64,3).
            hid = jnp.dot(flat.astype(jnp.bfloat16), wl1[...],
                          preferred_element_type=jnp.float32) + bl1
            hid = jnp.maximum(hid, 0.0)
            cls = jnp.dot(hid.astype(jnp.bfloat16), wl2[...],
                          preferred_element_type=jnp.float32) + bl2         # nonzero only 120..122
            # single lane-dense store: embedding in cols 0..119, logits in 120..122
            out_ref[pl.ds(r0, sub), :] = flat + cls

        if nsub == 1:
            rows(0)
        else:
            # bt > 128 -> sub == 128 by construction; sub-tile so each iteration's
            # (sub,128) f32 intermediates fit the 64-vreg file (no spills).
            @pl.loop(0, nsub)
            def _(s):
                rows(pl.multiple_of(s * sub, sub))

    return conv_eeg_kernel


# ---------------- glue: banded weights, packing, pallas_call ----------------

def _banded_w1(w1):
    """w1: (C1,1,K) -> (F, C1*L1) so (x @ W)[b, c*L1+l] = sum_k x[b, l+k]*w1[c,0,k]."""
    w1s = w1[:, 0, :]                                  # (C1, K)
    f = jnp.arange(FEATURES)[:, None]                  # (F, 1)
    col = jnp.arange(C1 * L1)[None, :]                 # (1, C1*L1)
    c, l = col // L1, col % L1
    k = f - l                                          # (F, C1*L1)
    valid = (k >= 0) & (k < K)
    vals = w1s[c, jnp.clip(k, 0, K - 1)]
    return jnp.where(valid, vals, 0.0).astype(jnp.float32)


def _banded_w2(w2):
    """w2: (C2,C1,K) -> (C1*L1, C2*L2) preserving channel-major flatten ordering."""
    row = jnp.arange(C1 * L1)[:, None]                 # (C1*L1, 1)
    cin, l = row // L1, row % L1
    col = jnp.arange(C2 * L2)[None, :]                 # (1, C2*L2)
    d, m = col // L2, col % L2
    k = l - m                                          # (C1*L1, C2*L2)
    valid = (k >= 0) & (k < K)
    vals = w2[d, cin, jnp.clip(k, 0, K - 1)]
    return jnp.where(valid, vals, 0.0).astype(jnp.float32)


def _pad_last(a, n):
    return jnp.pad(a, [(0, 0)] * (a.ndim - 1) + [(0, n - a.shape[-1])])


def _build_packed_params(p):
    # Fold conv bias + eval-mode BatchNorm into per-channel scale/shift.
    s1 = p["g1"] / jnp.sqrt(p["v1"] + BN_EPS)
    t1 = (p["b1"] - p["m1"]) * s1 + p["be1"]
    s2 = p["g2"] / jnp.sqrt(p["v2"] + BN_EPS)
    t2 = (p["b2"] - p["m2"]) * s2 + p["be2"]

    w1b = _pad_last(_banded_w1(p["w1"]), LANES)                                      # (16,128)
    w2b = _banded_w2(p["w2"])                                                        # (70,120)
    w2b = _pad_last(jnp.pad(w2b, ((0, H1_PAD - C1 * L1), (0, 0))), LANES)            # (128,128)
    wl1 = _pad_last(jnp.pad(p["wl1"].T, ((0, EMBED_PAD - EMBED_DIM), (0, 0))), LANES)  # (128,128)
    wl2 = jnp.zeros((HID_PAD, LANES), jnp.float32)
    wl2 = wl2.at[:HIDDEN, EMBED_DIM:EMBED_DIM + CLASS_NUM].set(p["wl2"].T)           # logits -> 120..122
    w_stack = jnp.concatenate([w1b, w2b, wl1, wl2], axis=0).astype(jnp.bfloat16)     # (400,128)

    vec = jnp.zeros((8, LANES), jnp.float32)
    vec = vec.at[0, :C1 * L1].set(jnp.repeat(s1, L1))
    vec = vec.at[1, :C1 * L1].set(jnp.repeat(t1, L1))
    vec = vec.at[2, :EMBED_DIM].set(jnp.repeat(s2, L2))
    vec = vec.at[3, :EMBED_DIM].set(jnp.repeat(t2, L2))
    vec = vec.at[4, :HIDDEN].set(p["bl1"])
    vec = vec.at[5, EMBED_DIM:EMBED_DIM + CLASS_NUM].set(p["bl2"])
    return w_stack, vec


def conv_eeg_forward(x_nchw, p, block_batch=128):
    """x_nchw: (B, 1, FEATURES) f32 -> (encoded_embed (B,10,F-4), logits (B,CLASS_NUM))."""
    B = x_nchw.shape[0]
    x2d = x_nchw.reshape(B, FEATURES)

    w_stack, vec = _build_packed_params(p)

    # Batch tiling: clamp to the real batch, guarantee >=2 grid steps when possible
    # (v7x megacore), keep 128-row sub-tiles exact for bt > 128.
    b_rounded = _round_up(B, ALIGN)
    bt = min(_round_up(int(block_batch), ALIGN), b_rounded)
    if b_rounded // bt < 2 and b_rounded >= 2 * ALIGN:
        bt = _round_up((b_rounded + 1) // 2, ALIGN)
    if bt > 128:
        bt = _round_up(bt, 128)
    sub = min(bt, 128)
    b_pad = _round_up(b_rounded, bt)
    grid = (b_pad // bt,)

    x_pad = jnp.pad(x2d, ((0, b_pad - B), (0, 0))).astype(jnp.bfloat16)

    const2 = lambda i: (0, 0)
    row_map = lambda i: (i, 0)

    out = pl.pallas_call(
        _make_kernel(bt, sub),
        out_shape=jax.ShapeDtypeStruct((b_pad, LANES), jnp.float32),
        grid=grid,
        in_specs=[
            pl.BlockSpec((bt, FEATURES), row_map),
            pl.BlockSpec((W_ROWS, LANES), const2),   # constant block index -> DMA'd once
            pl.BlockSpec((8, LANES), const2),
        ],
        out_specs=pl.BlockSpec((bt, LANES), row_map),
        compiler_params=pltpu.CompilerParams(dimension_semantics=("parallel",)),
    )(x_pad, w_stack, vec)

    flat = out[:B, :EMBED_DIM]
    logits = out[:B, EMBED_DIM:EMBED_DIM + CLASS_NUM]
    encoded_embed = flat.reshape(B, C2, L2)
    return encoded_embed, logits


# ---------------- params + pure-JAX reference ----------------

def init_params(key):
    ks = jax.random.split(key, 12)
    p = {
        "w1": jax.random.normal(ks[0], (C1, 1, K), jnp.float32) * 0.3,
        "b1": jax.random.normal(ks[1], (C1,), jnp.float32) * 0.1,
        "g1": 1.0 + 0.1 * jax.random.normal(ks[2], (C1,), jnp.float32),
        "be1": 0.1 * jax.random.normal(ks[3], (C1,), jnp.float32),
        "m1": 0.1 * jax.random.normal(ks[4], (C1,), jnp.float32),
        "v1": 1.0 + 0.1 * jnp.abs(jax.random.normal(ks[5], (C1,), jnp.float32)),
        "w2": jax.random.normal(ks[6], (C2, C1, K), jnp.float32) * 0.2,
        "b2": jax.random.normal(ks[7], (C2,), jnp.float32) * 0.1,
        "g2": 1.0 + 0.1 * jax.random.normal(ks[8], (C2,), jnp.float32),
        "be2": 0.1 * jax.random.normal(ks[9], (C2,), jnp.float32),
        "m2": 0.1 * jax.random.normal(ks[10], (C2,), jnp.float32),
        "v2": 1.0 + 0.1 * jnp.abs(jax.random.normal(ks[11], (C2,), jnp.float32)),
    }
    kl = jax.random.split(jax.random.fold_in(key, 7), 4)
    p["wl1"] = jax.random.normal(kl[0], (HIDDEN, EMBED_DIM), jnp.float32) * 0.05
    p["bl1"] = jax.random.normal(kl[1], (HIDDEN,), jnp.float32) * 0.05
    p["wl2"] = jax.random.normal(kl[2], (CLASS_NUM, HIDDEN), jnp.float32) * 0.05
    p["bl2"] = jax.random.normal(kl[3], (CLASS_NUM,), jnp.float32) * 0.05
    return p


def ref_forward(x_nchw, p):
    """Pure-JAX f32 reference (mirrors PyTorch eval forward, default method path)."""
    x = x_nchw[:, 0, :]
    patches1 = jnp.stack([x[:, k:k + L1] for k in range(K)], axis=-1)        # (B,L1,K)
    c1 = jnp.einsum("blk,ck->bcl", patches1, p["w1"][:, 0, :]) + p["b1"][None, :, None]
    c1 = (c1 - p["m1"][None, :, None]) / jnp.sqrt(p["v1"][None, :, None] + BN_EPS)
    c1 = c1 * p["g1"][None, :, None] + p["be1"][None, :, None]
    c1 = jnp.where(c1 > 0, c1, LEAKY * c1)
    patches2 = jnp.stack([c1[:, :, k:k + L2] for k in range(K)], axis=-1)    # (B,C1,L2,K)
    c2 = jnp.einsum("bclk,dck->bdl", patches2, p["w2"]) + p["b2"][None, :, None]
    c2 = (c2 - p["m2"][None, :, None]) / jnp.sqrt(p["v2"][None, :, None] + BN_EPS)
    c2 = c2 * p["g2"][None, :, None] + p["be2"][None, :, None]
    c2 = jnp.where(c2 > 0, c2, LEAKY * c2)
    flat = c2.reshape(x.shape[0], -1)
    hid = jnp.maximum(flat @ p["wl1"].T + p["bl1"], 0.0)
    logits = hid @ p["wl2"].T + p["bl2"]
    return c2, logits


if __name__ == "__main__":
    key = jax.random.PRNGKey(0)
    pk, xk = jax.random.split(key)
    params = init_params(pk)

    B = 64
    x = jax.random.normal(xk, (B, 1, FEATURES), jnp.float32)   # PyTorch NCL input

    # bt clamps to 32 here (B=64 split into 2 parallel tiles -> both v7x TCs busy).
    encoded, logits = conv_eeg_forward(x, params)
    jax.block_until_ready((encoded, logits))

    ref_encoded, ref_logits = ref_forward(x, params)
    # bf16 MXU operands with f32 accumulation -> loosened tolerance vs the f32 reference.
    assert jnp.allclose(encoded, ref_encoded, rtol=3e-2, atol=3e-2)
    assert jnp.allclose(logits, ref_logits, rtol=3e-2, atol=3e-2)

    print("KERNEL_OK")
</pallas_src>

<mosaic_0001>
module attributes {stable_mosaic.version = 11 : i64} {
  func.func @conv_eeg_kernel(%arg0: i32, %arg1: memref<32x16xbf16, #tpu.memory_space<vmem>>, %arg2: memref<400x128xbf16, #tpu.memory_space<vmem>>, %arg3: memref<8x128xf32, #tpu.memory_space<vmem>>, %arg4: memref<32x128xf32, #tpu.memory_space<vmem>>) attributes {dimension_semantics = [#tpu.dimension_semantics<parallel>], iteration_bounds = array<i64: 2>, scalar_prefetch = 0 : i64, scratch_operands = 0 : i64, tpu.core_type = #tpu.core_type<tc>, window_params = [{transform_indices = @transform_0, window_bounds = array<i64: 32, 16>}, {pipeline_mode = #tpu.pipeline_mode<synchronous>, transform_indices = @transform_1, window_bounds = array<i64: 400, 128>}, {pipeline_mode = #tpu.pipeline_mode<synchronous>, transform_indices = @transform_2, window_bounds = array<i64: 8, 128>}, {transform_indices = @transform_3, window_bounds = array<i64: 32, 128>}]} {
    %c0 = arith.constant 0 : index
    %c0_0 = arith.constant 0 : index
    %0 = vector.load %arg3[%c0, %c0_0] : memref<8x128xf32, #tpu.memory_space<vmem>>, vector<1x128xf32>
    %c1 = arith.constant 1 : index
    %c0_1 = arith.constant 0 : index
    %1 = vector.load %arg3[%c1, %c0_1] : memref<8x128xf32, #tpu.memory_space<vmem>>, vector<1x128xf32>
    %c2 = arith.constant 2 : index
    %c0_2 = arith.constant 0 : index
    %2 = vector.load %arg3[%c2, %c0_2] : memref<8x128xf32, #tpu.memory_space<vmem>>, vector<1x128xf32>
    %c3 = arith.constant 3 : index
    %c0_3 = arith.constant 0 : index
    %3 = vector.load %arg3[%c3, %c0_3] : memref<8x128xf32, #tpu.memory_space<vmem>>, vector<1x128xf32>
    %c4 = arith.constant 4 : index
    %c0_4 = arith.constant 0 : index
    %4 = vector.load %arg3[%c4, %c0_4] : memref<8x128xf32, #tpu.memory_space<vmem>>, vector<1x128xf32>
    %c5 = arith.constant 5 : index
    %c0_5 = arith.constant 0 : index
    %5 = vector.load %arg3[%c5, %c0_5] : memref<8x128xf32, #tpu.memory_space<vmem>>, vector<1x128xf32>
    %c0_6 = arith.constant 0 : index
    %c0_7 = arith.constant 0 : index
    %6 = vector.load %arg1[%c0_6, %c0_7] : memref<32x16xbf16, #tpu.memory_space<vmem>>, vector<32x16xbf16>
    %c0_8 = arith.constant 0 : index
    %c0_9 = arith.constant 0 : index
    %7 = vector.load %arg2[%c0_8, %c0_9] : memref<400x128xbf16, #tpu.memory_space<vmem>>, vector<16x128xbf16>
    %cst = arith.constant dense<0.000000e+00> : vector<32x128xf32>
    %8 = tpu.matmul %6, %7, %cst {dimension_numbers = #tpu.dot_dimension_numbers<[1], [0], [0], [1], [0, 0, 1, 1], [], []>} : vector<32x16xbf16>, vector<16x128xbf16>, vector<32x128xf32> -> vector<32x128xf32>
    %9 = vector.broadcast %0 : vector<1x128xf32> to vector<32x128xf32>
    %10 = arith.mulf %8, %9 : vector<32x128xf32>
    %11 = vector.broadcast %1 : vector<1x128xf32> to vector<32x128xf32>
    %12 = arith.addf %10, %11 : vector<32x128xf32>
    %cst_10 = arith.constant 0.000000e+00 : f32
    %13 = vector.broadcast %cst_10 : f32 to vector<32x128xf32>
    %14 = arith.cmpf ogt, %12, %13 : vector<32x128xf32>
    %cst_11 = arith.constant 3.000000e-01 : f32
    %15 = vector.broadcast %cst_11 : f32 to vector<32x128xf32>
    %16 = arith.mulf %15, %12 : vector<32x128xf32>
    %17 = arith.select %14, %12, %16 : vector<32x128xi1>, vector<32x128xf32>
    %18 = arith.truncf %17 : vector<32x128xf32> to vector<32x128xbf16>
    %c16 = arith.constant 16 : index
    %c0_12 = arith.constant 0 : index
    %19 = vector.load %arg2[%c16, %c0_12] : memref<400x128xbf16, #tpu.memory_space<vmem>>, vector<128x128xbf16>
    %cst_13 = arith.constant dense<0.000000e+00> : vector<32x128xf32>
    %20 = tpu.matmul %18, %19, %cst_13 {dimension_numbers = #tpu.dot_dimension_numbers<[1], [0], [0], [1], [0, 0, 1, 1], [], []>} : vector<32x128xbf16>, vector<128x128xbf16>, vector<32x128xf32> -> vector<32x128xf32>
    %21 = vector.broadcast %2 : vector<1x128xf32> to vector<32x128xf32>
    %22 = arith.mulf %20, %21 : vector<32x128xf32>
    %23 = vector.broadcast %3 : vector<1x128xf32> to vector<32x128xf32>
    %24 = arith.addf %22, %23 : vector<32x128xf32>
    %cst_14 = arith.constant 0.000000e+00 : f32
    %25 = vector.broadcast %cst_14 : f32 to vector<32x128xf32>
    %26 = arith.cmpf ogt, %24, %25 : vector<32x128xf32>
    %cst_15 = arith.constant 3.000000e-01 : f32
    %27 = vector.broadcast %cst_15 : f32 to vector<32x128xf32>
    %28 = arith.mulf %27, %24 : vector<32x128xf32>
    %29 = arith.select %26, %24, %28 : vector<32x128xi1>, vector<32x128xf32>
    %30 = arith.truncf %29 : vector<32x128xf32> to vector<32x128xbf16>
    %c144 = arith.constant 144 : index
    %c0_16 = arith.constant 0 : index
    %31 = vector.load %arg2[%c144, %c0_16] : memref<400x128xbf16, #tpu.memory_space<vmem>>, vector<128x128xbf16>
    %cst_17 = arith.constant dense<0.000000e+00> : vector<32x128xf32>
    %32 = tpu.matmul %30, %31, %cst_17 {dimension_numbers = #tpu.dot_dimension_numbers<[1], [0], [0], [1], [0, 0, 1, 1], [], []>} : vector<32x128xbf16>, vector<128x128xbf16>, vector<32x128xf32> -> vector<32x128xf32>
    %33 = vector.broadcast %4 : vector<1x128xf32> to vector<32x128xf32>
    %34 = arith.addf %32, %33 : vector<32x128xf32>
    %cst_18 = arith.constant 0.000000e+00 : f32
    %35 = vector.broadcast %cst_18 : f32 to vector<32x128xf32>
    %36 = arith.maximumf %34, %35 : vector<32x128xf32>
    %37 = arith.truncf %36 : vector<32x128xf32> to vector<32x128xbf16>
    %c272 = arith.constant 272 : index
    %c0_19 = arith.constant 0 : index
    %38 = vector.load %arg2[%c272, %c0_19] : memref<400x128xbf16, #tpu.memory_space<vmem>>, vector<128x128xbf16>
    %cst_20 = arith.constant dense<0.000000e+00> : vector<32x128xf32>
    %39 = tpu.matmul %37, %38, %cst_20 {dimension_numbers = #tpu.dot_dimension_numbers<[1], [0], [0], [1], [0, 0, 1, 1], [], []>} : vector<32x128xbf16>, vector<128x128xbf16>, vector<32x128xf32> -> vector<32x128xf32>
    %40 = vector.broadcast %5 : vector<1x128xf32> to vector<32x128xf32>
    %41 = arith.addf %39, %40 : vector<32x128xf32>
    %42 = arith.addf %29, %41 : vector<32x128xf32>
    %c0_21 = arith.constant 0 : index
    %c0_22 = arith.constant 0 : index
    %43 = vector.load %arg4[%c0_21, %c0_22] : memref<32x128xf32, #tpu.memory_space<vmem>>, vector<32x128xf32>
    tpu.vector_store %arg4[%c0_21, %c0_22], %42 {strides = array<i32>} : memref<32x128xf32, #tpu.memory_space<vmem>>, vector<32x128xf32>,
    return
  }
  func.func @transform_0(%arg0: i32) -> (i32, i32) {
    %c0_i32 = arith.constant 0 : i32
    %c0_i32_0 = arith.constant 0 : i32
    return %arg0, %c0_i32 : i32, i32
  }
  func.func @transform_1(%arg0: i32) -> (i32, i32) {
    %c0_i32 = arith.constant 0 : i32
    %c0_i32_0 = arith.constant 0 : i32
    %c0_i32_1 = arith.constant 0 : i32
    return %c0_i32, %c0_i32_0 : i32, i32
  }
  func.func @transform_2(%arg0: i32) -> (i32, i32) {
    %c0_i32 = arith.constant 0 : i32
    %c0_i32_0 = arith.constant 0 : i32
    %c0_i32_1 = arith.constant 0 : i32
    return %c0_i32, %c0_i32_0 : i32, i32
  }
  func.func @transform_3(%arg0: i32) -> (i32, i32) {
    %c0_i32 = arith.constant 0 : i32
    %c0_i32_0 = arith.constant 0 : i32
    return %arg0, %c0_i32 : i32, i32
  }
}

</mosaic_0001>

<llo_original>
// kernel: tpu_custom_call.1
$region0: #{tpu_custom_call.1}
  #allocation0 [shape = 'u32[]', space=smem, size = 0x4, offset = 0x4, fixed_abs, tag = 'smem constant byte address 0x4 - core index']
  #allocation1 [shape = 'u32[144,128]{1,0:T(1,128)}', space=vmem, size = 0x12000, scoped, tag = 'internal scratch']
  %s0 = inlined_call_operand.vmem [shape: bf16[64,16], index: 0, kind: input, shape index: {}]
  %s1 = inlined_call_operand.hbm [shape: bf16[400,128], index: 1, kind: input, shape index: {}]
  %s2 = inlined_call_operand.vmem [shape: f32[8,128], index: 2, kind: input, shape index: {}]
  %s3 = inlined_call_operand.hbm [shape: f32[64,128], index: 3, kind: output, shape index: {}]
  %s4 = sld [smem:[#allocation0]]
  $region49: #{tpu_custom_call.1} parent=0
    _
  %s6 = ssub.s32 1, %s4
  %s7 = scalar_select 0, %s6, %s4
  $region1: #{tpu_custom_call.1} parent=0
    #allocation2 [shape = 'u8[102400]{0}', space=vmem, size = 0x19000, scoped, tag = 'input window, operand 1, single buffered']
    #allocation3 [shape = 's32[2]{0}', space=sflag, size = 0x8, scoped, tag = 'scoped memory for tpu_custom_call.1']
    #allocation4 [shape = 's32[2]{0}', space=sflag, size = 0x8, scoped, tag = 'scoped memory for tpu_custom_call.1']
    #allocation5 [shape = 'u8[32768]{0}', space=vmem, size = 0x8000, scoped, tag = 'output window, operand 0']
    %8 = vsyncpa [#allocation3], 0
    %9 = vsyncpa [#allocation4], 0
    %s10 = scalar_lea.sflag [#allocation4], 1
    %11 = vsyncpa %s10, 0
    loop: start=0, step=1, limit=4
    $region2: #{tpu_custom_call.1} parent=1 // loop_pre_header
      _
    $region3: #{tpu_custom_call.1} parent=1 // loop_header
      %s13 = sphi 0, %s17
      %p14 = scmp.ge.s32.totalorder %s13, 4
      %s23 = sphi 0, %s25
      %s26 = sphi 0, %s23
      %s27 = sphi 0, %s26
      %s43 = sphi 0, %s27
      %s47 = sphi 0, %s47
      %s49 = sphi 0, %s47
      %s50 = sphi 0, %s49
      %s64 = sphi 0, %s50
      %s68 = sphi 0, %s68
      %s70 = sphi 0, %s68
      %s71 = sphi 0, %s70
      %s85 = sphi 0, %s71
      %s91 = sphi 0, %s93
      %s94 = sphi 0, %s91
      %s95 = sphi 0, %s94
      %s111 = sphi 0, %s95
    $region4: #{tpu_custom_call.1} parent=1 // loop_header_branch
      %16 = sbr.rel (%p14) target = $region8
    $region5: #{tpu_custom_call.1} parent=1 // loop_body
      %s18 = ssub.s32 %s13, 1
      %s19 = ssub.s32 %s13, 2
      %s20 = sadd.s32 %s13, 1
      %s21 = ssub.s32 %s13, %s20
      %p22 = scmp.eq.s32.totalorder %s21, 0
      %s24 = sadd.s32 %s23, 1
      %s25 = scalar_select %p22, %s23, %s24
      %p28 = pneg %p22
      %p29 = scmp.eq.s32.totalorder %s13, 1
      %p30 = por %p28, %p29
      %p31 = scmp.ne.s32.totalorder %s23, %s26
      %p32 = scmp.eq.s32.totalorder %s13, 0
      %p33 = por %p31, %p32
      %p34 = scmp.ne.s32.totalorder %s23, %s26
      %p35 = scmp.eq.s32.totalorder %s18, 1
      %p36 = por %p34, %p35
      %p37 = scmp.ne.s32.totalorder %s26, %s27
      %p38 = scmp.eq.s32.totalorder %s18, 0
      %p39 = por %p37, %p38
      %p40 = scmp.ne.s32.totalorder %s26, %s27
      %p41 = scmp.eq.s32.totalorder %s19, 1
      %p42 = por %p40, %p41
      %p44 = scmp.ne.s32.totalorder %s27, %s43
      %p45 = scmp.eq.s32.totalorder %s19, 0
      %p46 = por %p44, %p45
      %s48 = sadd.s32 %s47, 1
      %p51 = scmp.eq.s32.totalorder %s13, 1
      %p52 = scmp.ne.s32.totalorder %s47, %s49
      %p53 = scmp.eq.s32.totalorder %s13, 0
      %p54 = por %p52, %p53
      %p55 = scmp.ne.s32.totalorder %s47, %s49
      %p56 = scmp.eq.s32.totalorder %s18, 1
      %p57 = por %p55, %p56
      %p58 = scmp.ne.s32.totalorder %s49, %s50
      %p59 = scmp.eq.s32.totalorder %s18, 0
      %p60 = por %p58, %p59
      %p61 = scmp.ne.s32.totalorder %s49, %s50
      %p62 = scmp.eq.s32.totalorder %s19, 1
      %p63 = por %p61, %p62
      %p65 = scmp.ne.s32.totalorder %s50, %s64
      %p66 = scmp.eq.s32.totalorder %s19, 0
      %p67 = por %p65, %p66
      %s69 = sadd.s32 %s68, 1
      %p72 = scmp.eq.s32.totalorder %s13, 1
      %p73 = scmp.ne.s32.totalorder %s68, %s70
      %p74 = scmp.eq.s32.totalorder %s13, 0
      %p75 = por %p73, %p74
      %p76 = scmp.ne.s32.totalorder %s68, %s70
      %p77 = scmp.eq.s32.totalorder %s18, 1
      %p78 = por %p76, %p77
      %p79 = scmp.ne.s32.totalorder %s70, %s71
      %p80 = scmp.eq.s32.totalorder %s18, 0
      %p81 = por %p79, %p80
      %p82 = scmp.ne.s32.totalorder %s70, %s71
      %p83 = scmp.eq.s32.totalorder %s19, 1
      %p84 = por %p82, %p83
      %p86 = scmp.ne.s32.totalorder %s71, %s85
      %p87 = scmp.eq.s32.totalorder %s19, 0
      %p88 = por %p86, %p87
      %s89 = ssub.s32 %s13, %s20
      %p90 = scmp.eq.s32.totalorder %s89, 0
      %s92 = sadd.s32 %s91, 1
      %s93 = scalar_select %p90, %s91, %s92
      %p96 = pneg %p90
      %p97 = scmp.eq.s32.totalorder %s13, 1
      %p98 = por %p96, %p97
      %p99 = scmp.ne.s32.totalorder %s91, %s94
      %p100 = scmp.eq.s32.totalorder %s13, 0
      %p101 = por %p99, %p100
      %p102 = scmp.ne.s32.totalorder %s91, %s94
      %p103 = scmp.eq.s32.totalorder %s18, 1
      %p104 = por %p102, %p103
      %p105 = scmp.ne.s32.totalorder %s94, %s95
      %p106 = scmp.eq.s32.totalorder %s18, 0
      %p107 = por %p105, %p106
      %p108 = scmp.ne.s32.totalorder %s94, %s95
      %p109 = scmp.eq.s32.totalorder %s19, 1
      %p110 = por %p108, %p109
      %p112 = scmp.ne.s32.totalorder %s95, %s111
      %p113 = scmp.eq.s32.totalorder %s19, 0
      %p114 = por %p112, %p113
      %p115 = scmp.le.s32.totalorder 1, %s13
      %p116 = scmp.lt.s32.totalorder %s13, 3
      %p117 = pnand %p115, %p116
      %p118 = pneg %p117
      // Predicated region
      $region9: #{tpu_custom_call.1} parent=5 // pred_check
        _
      $region10: #{tpu_custom_call.1} parent=5 // pred_check_branch
        %120 = sbr.rel (%p117) target = $region12
      $region11: #{tpu_custom_call.1} parent=5 // pred_region
        %s121 = ssub.s32 %s13, 1
        // Predicated region
        $region13: #{tpu_custom_call.1} parent=11 // pred_check
          %p122 = pneg %p60
        $region14: #{tpu_custom_call.1} parent=11 // pred_check_branch
          %124 = sbr.rel (%p122) target = $region16
        $region15: #{tpu_custom_call.1} parent=11 // pred_region
          %s126 = ssub.s32 3200, 3200
          %127 = vsyncadd [#allocation3], %s126
          %s128 = sshll.u32 [#allocation2], 4
          %s129 = int_to_ptr.vmem [resolvable:$true] %s128
          %134 = dma.hbm_to_vmem [thread:$0]  %s1, 3200, %s129, [#allocation3], 64, 64, 4
        $region16: #{tpu_custom_call.1} parent=11 // pred_fallthru
          _
        // Predicated region
        $region17: #{tpu_custom_call.1} parent=11 // pred_check
          %p135 = pneg %p81
        $region18: #{tpu_custom_call.1} parent=11 // pred_check_branch
          %137 = sbr.rel (%p135) target = $region20
        $region19: #{tpu_custom_call.1} parent=11 // pred_region
          _
        $region20: #{tpu_custom_call.1} parent=11 // pred_fallthru
          _
      $region12: #{tpu_custom_call.1} parent=5 // pred_fallthru
        _
      %p138 = scmp.lt.s32.totalorder %s13, 2
      // Predicated region
      $region21: #{tpu_custom_call.1} parent=5 // pred_check
        %p139 = pneg %p138
      $region22: #{tpu_custom_call.1} parent=5 // pred_check_branch
        %141 = sbr.rel (%p139) target = $region24
      $region23: #{tpu_custom_call.1} parent=5 // pred_region
        // Predicated region
        $region25: #{tpu_custom_call.1} parent=23 // pred_check
          %p142 = pneg %p33
        $region26: #{tpu_custom_call.1} parent=23 // pred_check_branch
          %144 = sbr.rel (%p142) target = $region28
        $region27: #{tpu_custom_call.1} parent=23 // pred_region
          %s145 = smul.u32 4, %s13
          %p146 = scmp.lt.s32.totalorder %s145, 7
          %s147 = scalar_select %p146, %s145, 7
          %s148 = smul.addr %s147, 4
          %s149 = scalar_lea.vmem %s0, %s148
          %s150 = smul.u32 4, %s13
        $region28: #{tpu_custom_call.1} parent=23 // pred_fallthru
          _
      $region24: #{tpu_custom_call.1} parent=5 // pred_fallthru
        _
      %p151 = scmp.le.s32.totalorder 1, %s13
      %p152 = scmp.lt.s32.totalorder %s13, 3
      %p153 = pnand %p151, %p152
      %p154 = pneg %p153
      // Predicated region
      $region29: #{tpu_custom_call.1} parent=5 // pred_check
        _
      $region30: #{tpu_custom_call.1} parent=5 // pred_check_branch
        %156 = sbr.rel (%p153) target = $region32
      $region31: #{tpu_custom_call.1} parent=5 // pred_region
        %s157 = ssub.s32 %s13, 1
        // Predicated region
        $region33: #{tpu_custom_call.1} parent=31 // pred_check
          %p158 = pneg %p60
        $region34: #{tpu_custom_call.1} parent=31 // pred_check_branch
          %160 = sbr.rel (%p158) target = $region36
        $region35: #{tpu_custom_call.1} parent=31 // pred_region
          %161 = dma.done [#allocation3], 3200
        $region36: #{tpu_custom_call.1} parent=31 // pred_fallthru
          _
        %s162 = smul.u32 4, %s18
        %p163 = scmp.lt.s32.totalorder %s162, 7
        %s164 = scalar_select %p163, %s162, 7
        %s165 = smul.addr %s164, 4
        %s166 = scalar_lea.vmem %s0, %s165
        %p167 = pneg %p39
        %p168 = pneg %p36
        %p169 = pneg %p60
        %p170 = pneg %p57
        %p171 = pneg %p81
        %p172 = pneg %p78
        %p173 = pneg %p107
        %p174 = pneg %p104
        %s175 = sand.u32 %s94, 1
        %s176 = scalar_lea.sflag [#allocation4], %s175
        %s177 = sand.u32 %s94, 1
        %s178 = smul.addr %s177, 32
        %s179 = scalar_lea.vmem [#allocation5], %s178
        %s180 = smul.u32 4, %s18
        %p181 = scmp.lt.s32.totalorder %s180, 7
        %s182 = scalar_select %p181, %s180, 7
        %s183 = smul.addr %s182, 4
        %s184 = scalar_lea.vmem %s0, %s183
        %s185 = smul.u32 4, %s18
        %s186 = smul.u32 4, %s18
        %v188 = vld [vmem:[%s2] sm:$0x1]
        %v189 = vld [vmem:[%s2 + $0x1] sm:$0x1]
        %v190 = vld [vmem:[%s2 + $0x2] sm:$0x1]
        %v191 = vld [vmem:[%s2 + $0x3] sm:$0x1]
        %v192 = vld [vmem:[%s2 + $0x4] sm:$0x1]
        %v193 = vld [vmem:[%s2 + $0x5] sm:$0x1]
        %v194 = vld [vmem:[%s184] sm:$0xf]
        %v195 = vld [vmem:[%s184 + $0x4] sm:$0xf]
        %v196 = vld [vmem:[%s184 + $0x8] sm:$0xf]
        %v197 = vld [vmem:[%s184 + $0xc] sm:$0xf]
        %v198 = vld [vmem:[#allocation2] sm:$0xf]
        %v199 = vld [vmem:[#allocation2 + $0x4] sm:$0xf]
        %v204 = vunpack.c.l.b16 %v194
        %v205 = vunpack.c.l.b16 %v195
        %v206 = vunpack.c.l.b16 %v196
        %v207 = vunpack.c.l.b16 %v197
        %v208 = vpack.c.b16 %v205, %v204
        %v209 = vpack.c.b16 %v207, %v206
        %v212 = vunpack.c.l.b16 %v198
        %v213 = vunpack.c.l.b16 %v199
        %v214 = vpack.c.b16 %v213, %v212
        %vm216 = vcmask 130048
        %v218 = vsel %vm216, %v208, 0
        %v221 = vsel %vm216, %v209, 0
        %223 = vmatprep.subr.bf16.mxu0 0
        %224 = vmatpush1.bf16.msra.mxu0 %v214
        %225 = vmatprep.subr.bf16.mxu0 0
        %226 = vmatpush1.bf16.msra.mxu0 0
        %227 = vmatprep.subr.bf16.mxu0 0
        %228 = vmatpush1.bf16.msra.mxu0 0
        %229 = vmatprep.subr.bf16.mxu0 0
        %230 = vmatpush1.bf16.msra.mxu0 0
        %231 = vmatprep.subr.bf16.mxu0 0
        %232 = vmatpush1.bf16.msra.mxu0 0
        %233 = vmatprep.subr.bf16.mxu0 0
        %234 = vmatpush1.bf16.msra.mxu0 0
        %235 = vmatprep.subr.bf16.mxu0 0
        %236 = vmatpush1.bf16.msra.mxu0 0
        %237 = vmatprep.subr.bf16.mxu0 0
        %238 = vmatpush1.bf16.msra.mxu0 0
        %239 = vmatprep.subr.bf16.mxu0 0
        %240 = vmatpush1.bf16.msra.mxu0 0
        %241 = vmatprep.subr.bf16.mxu0 0
        %242 = vmatpush1.bf16.msra.mxu0 0
        %243 = vmatprep.subr.bf16.mxu0 0
        %244 = vmatpush1.bf16.msra.mxu0 0
        %245 = vmatprep.subr.bf16.mxu0 0
        %246 = vmatpush1.bf16.msra.mxu0 0
        %247 = vmatprep.subr.bf16.mxu0 0
        %248 = vmatpush1.bf16.msra.mxu0 0
        %249 = vmatprep.subr.bf16.mxu0 0
        %250 = vmatpush1.bf16.msra.mxu0 0
        %251 = vmatprep.subr.bf16.mxu0 0
        %252 = vmatpush1.bf16.msra.mxu0 0
        %253 = vmatprep.subr.bf16.mxu0 0
        %254 = vmatpush1.bf16.msra.mxu0 0
        %255 = vmatprep.mubr.bf16.mxu0 0
        %256 = vmatmul.mubr.bf16.gmra.mrb[0].mxu0 %v218
        %v257 = vpop.f32.mrb[0].mxu0
        %v258 = vadd.f32 0.0, %v257
        %v259 = vpop.f32.mrb[0].mxu0
        %v260 = vpop.f32.mrb[0].mxu0
        %v261 = vadd.f32 0.0, %v260
        %v262 = vpop.f32.mrb[0].mxu0
        %263 = vmatprep.mubr.bf16.mxu0 0
        %264 = vmatmul.mubr.bf16.gmra.mrb[0].mxu0 %v221
        %v265 = vpop.f32.mrb[0].mxu0
        %v266 = vadd.f32 0.0, %v265
        %v267 = vpop.f32.mrb[0].mxu0
        %v268 = vpop.f32.mrb[0].mxu0
        %v269 = vadd.f32 0.0, %v268
        %v270 = vpop.f32.mrb[0].mxu0
        %271 = vdwg.mxu0
        %v272 = vlaneseq
        %v273 = vshrl.u32 %v272, 7
        %v274 = vsub.s32 0, %v273
        %v275 = vrot.slane %v188, %v274
        %v276 = vmul.f32 %v258, %v275
        %v277 = vmul.f32 %v261, %v275
        %v278 = vmul.f32 %v266, %v275
        %v279 = vmul.f32 %v269, %v275
        %v280 = vlaneseq
        %v281 = vshrl.u32 %v280, 7
        %v282 = vsub.s32 0, %v281
        %v283 = vrot.slane %v189, %v282
        %v284 = vadd.f32 %v276, %v283
        %v285 = vadd.f32 %v277, %v283
        %v286 = vadd.f32 %v278, %v283
        %v287 = vadd.f32 %v279, %v283
        %vm288 = vcmp.gt.f32.partialorder %v284, 0.0
        %vm289 = vcmp.gt.f32.partialorder %v285, 0.0
        %vm290 = vcmp.gt.f32.partialorder %v286, 0.0
        %vm291 = vcmp.gt.f32.partialorder %v287, 0.0
        %v292 = vmul.f32 %v284, 0.3
        %v293 = vmul.f32 %v285, 0.3
        %v294 = vmul.f32 %v286, 0.3
        %v295 = vmul.f32 %v287, 0.3
        %v296 = vsel %vm288, %v284, %v292
        %v297 = vsel %vm289, %v285, %v293
        %v298 = vsel %vm290, %v286, %v294
        %v299 = vsel %vm291, %v287, %v295
        %v300 = vpack.c.bf16 %v297, %v296
        %v301 = vpack.c.bf16 %v299, %v298
        %v302 = vld [vmem:[#allocation2 + $0x8] sm:$0xf]
        %v303 = vld [vmem:[#allocation2 + $0xc] sm:$0xf]
        %v304 = vld [vmem:[#allocation2 + $0x10] sm:$0xf]
        %v305 = vld [vmem:[#allocation2 + $0x14] sm:$0xf]
        %v306 = vld [vmem:[#allocation2 + $0x18] sm:$0xf]
        %v307 = vld [vmem:[#allocation2 + $0x1c] sm:$0xf]
        %v308 = vld [vmem:[#allocation2 + $0x20] sm:$0xf]
        %v309 = vld [vmem:[#allocation2 + $0x24] sm:$0xf]
        %v310 = vld [vmem:[#allocation2 + $0x28] sm:$0xf]
        %v311 = vld [vmem:[#allocation2 + $0x2c] sm:$0xf]
        %v312 = vld [vmem:[#allocation2 + $0x30] sm:$0xf]
        %v313 = vld [vmem:[#allocation2 + $0x34] sm:$0xf]
        %v314 = vld [vmem:[#allocation2 + $0x38] sm:$0xf]
        %v315 = vld [vmem:[#allocation2 + $0x3c] sm:$0xf]
        %v316 = vld [vmem:[#allocation2 + $0x40] sm:$0xf]
        %v317 = vld [vmem:[#allocation2 + $0x44] sm:$0xf]
        %v334 = vunpack.c.l.b16 %v302
        %v335 = vunpack.c.l.b16 %v303
        %v336 = vunpack.c.l.b16 %v304
        %v337 = vunpack.c.l.b16 %v305
        %v338 = vunpack.c.l.b16 %v306
        %v339 = vunpack.c.l.b16 %v307
        %v340 = vunpack.c.l.b16 %v308
        %v341 = vunpack.c.l.b16 %v309
        %v342 = vunpack.c.l.b16 %v310
        %v343 = vunpack.c.l.b16 %v311
        %v344 = vunpack.c.l.b16 %v312
        %v345 = vunpack.c.l.b16 %v313
        %v346 = vunpack.c.l.b16 %v314
        %v347 = vunpack.c.l.b16 %v315
        %v348 = vunpack.c.l.b16 %v316
        %v349 = vunpack.c.l.b16 %v317
        %v350 = vpack.c.b16 %v335, %v334
        %v351 = vpack.c.b16 %v337, %v336
        %v352 = vpack.c.b16 %v339, %v338
        %v353 = vpack.c.b16 %v341, %v340
        %v354 = vpack.c.b16 %v343, %v342
        %v355 = vpack.c.b16 %v345, %v344
        %v356 = vpack.c.b16 %v347, %v346
        %v357 = vpack.c.b16 %v349, %v348
        %366 = vmatprep.subr.bf16.mxu0 0
        %367 = vmatpush1.bf16.msra.mxu0 %v350
        %368 = vmatprep.subr.bf16.mxu0 0
        %369 = vmatpush1.bf16.msra.mxu0 %v351
        %370 = vmatprep.subr.bf16.mxu0 0
        %371 = vmatpush1.bf16.msra.mxu0 %v352
        %372 = vmatprep.subr.bf16.mxu0 0
        %373 = vmatpush1.bf16.msra.mxu0 %v353
        %374 = vmatprep.subr.bf16.mxu0 0
        %375 = vmatpush1.bf16.msra.mxu0 %v354
        %376 = vmatprep.subr.bf16.mxu0 0
        %377 = vmatpush1.bf16.msra.mxu0 %v355
        %378 = vmatprep.subr.bf16.mxu0 0
        %379 = vmatpush1.bf16.msra.mxu0 %v356
        %380 = vmatprep.subr.bf16.mxu0 0
        %381 = vmatpush1.bf16.msra.mxu0 %v357
        %382 = vmatprep.subr.bf16.mxu0 0
        %383 = vmatpush1.bf16.msra.mxu0 0
        %384 = vmatprep.subr.bf16.mxu0 0
        %385 = vmatpush1.bf16.msra.mxu0 0
        %386 = vmatprep.subr.bf16.mxu0 0
        %387 = vmatpush1.bf16.msra.mxu0 0
        %388 = vmatprep.subr.bf16.mxu0 0
        %389 = vmatpush1.bf16.msra.mxu0 0
        %390 = vmatprep.subr.bf16.mxu0 0
        %391 = vmatpush1.bf16.msra.mxu0 0
        %392 = vmatprep.subr.bf16.mxu0 0
        %393 = vmatpush1.bf16.msra.mxu0 0
        %394 = vmatprep.subr.bf16.mxu0 0
        %395 = vmatpush1.bf16.msra.mxu0 0
        %396 = vmatprep.subr.bf16.mxu0 0
        %397 = vmatpush1.bf16.msra.mxu0 0
        %398 = vmatprep.mubr.bf16.mxu0 0
        %399 = vmatmul.mubr.bf16.gmra.mrb[0].mxu0 %v300
        %v400 = vpop.f32.mrb[0].mxu0
        %v401 = vadd.f32 0.0, %v400
        %v402 = vpop.f32.mrb[0].mxu0
        %v403 = vpop.f32.mrb[0].mxu0
        %v404 = vadd.f32 0.0, %v403
        %v405 = vpop.f32.mrb[0].mxu0
        %406 = vmatprep.mubr.bf16.mxu0 0
        %407 = vmatmul.mubr.bf16.gmra.mrb[0].mxu0 %v301
        %v408 = vpop.f32.mrb[0].mxu0
        %v409 = vadd.f32 0.0, %v408
        %v410 = vpop.f32.mrb[0].mxu0
        %v411 = vpop.f32.mrb[0].mxu0
        %v412 = vadd.f32 0.0, %v411
        %v413 = vpop.f32.mrb[0].mxu0
        %414 = vdwg.mxu0
        %v415 = vlaneseq
        %v416 = vshrl.u32 %v415, 7
        %v417 = vsub.s32 0, %v416
        %v418 = vrot.slane %v190, %v417
        %v419 = vmul.f32 %v401, %v418
        %v420 = vmul.f32 %v404, %v418
        %v421 = vmul.f32 %v409, %v418
        %v422 = vmul.f32 %v412, %v418
        %v423 = vlaneseq
        %v424 = vshrl.u32 %v423, 7
        %v425 = vsub.s32 0, %v424
        %v426 = vrot.slane %v191, %v425
        %v427 = vadd.f32 %v419, %v426
        %v428 = vadd.f32 %v420, %v426
        %v429 = vadd.f32 %v421, %v426
        %v430 = vadd.f32 %v422, %v426
        %vm431 = vcmp.gt.f32.partialorder %v427, 0.0
        %vm432 = vcmp.gt.f32.partialorder %v428, 0.0
        %vm433 = vcmp.gt.f32.partialorder %v429, 0.0
        %vm434 = vcmp.gt.f32.partialorder %v430, 0.0
        %v435 = vmul.f32 %v427, 0.3
        %v436 = vmul.f32 %v428, 0.3
        %v437 = vmul.f32 %v429, 0.3
        %v438 = vmul.f32 %v430, 0.3
        %v439 = vsel %vm431, %v427, %v435
        %v440 = vsel %vm432, %v428, %v436
        %v441 = vsel %vm433, %v429, %v437
        %v442 = vsel %vm434, %v430, %v438
        %v443 = vpack.c.bf16 %v440, %v439
        %v444 = vpack.c.bf16 %v442, %v441
        %v445 = vld [vmem:[#allocation2 + $0x48] sm:$0xf]
        %v446 = vld [vmem:[#allocation2 + $0x4c] sm:$0xf]
        %v447 = vld [vmem:[#allocation2 + $0x50] sm:$0xf]
        %v448 = vld [vmem:[#allocation2 + $0x54] sm:$0xf]
        %v449 = vld [vmem:[#allocation2 + $0x58] sm:$0xf]
        %v450 = vld [vmem:[#allocation2 + $0x5c] sm:$0xf]
        %v451 = vld [vmem:[#allocation2 + $0x60] sm:$0xf]
        %v452 = vld [vmem:[#allocation2 + $0x64] sm:$0xf]
        %v453 = vld [vmem:[#allocation2 + $0x68] sm:$0xf]
        %v454 = vld [vmem:[#allocation2 + $0x6c] sm:$0xf]
        %v455 = vld [vmem:[#allocation2 + $0x70] sm:$0xf]
        %v456 = vld [vmem:[#allocation2 + $0x74] sm:$0xf]
        %v457 = vld [vmem:[#allocation2 + $0x78] sm:$0xf]
        %v458 = vld [vmem:[#allocation2 + $0x7c] sm:$0xf]
        %v459 = vld [vmem:[#allocation2 + $0x80] sm:$0xf]
        %v460 = vld [vmem:[#allocation2 + $0x84] sm:$0xf]
        %v461 = vlaneseq
        %v462 = vshrl.u32 %v461, 7
        %v463 = vsub.s32 0, %v462
        %v464 = vrot.slane %v192, %v463
        %v481 = vunpack.c.l.b16 %v445
        %v482 = vunpack.c.l.b16 %v446
        %v483 = vunpack.c.l.b16 %v447
        %v484 = vunpack.c.l.b16 %v448
        %v485 = vunpack.c.l.b16 %v449
        %v486 = vunpack.c.l.b16 %v450
        %v487 = vunpack.c.l.b16 %v451
        %v488 = vunpack.c.l.b16 %v452
        %v489 = vunpack.c.l.b16 %v453
        %v490 = vunpack.c.l.b16 %v454
        %v491 = vunpack.c.l.b16 %v455
        %v492 = vunpack.c.l.b16 %v456
        %v493 = vunpack.c.l.b16 %v457
        %v494 = vunpack.c.l.b16 %v458
        %v495 = vunpack.c.l.b16 %v459
        %v496 = vunpack.c.l.b16 %v460
        %v497 = vpack.c.b16 %v482, %v481
        %v498 = vpack.c.b16 %v484, %v483
        %v499 = vpack.c.b16 %v486, %v485
        %v500 = vpack.c.b16 %v488, %v487
        %v501 = vpack.c.b16 %v490, %v489
        %v502 = vpack.c.b16 %v492, %v491
        %v503 = vpack.c.b16 %v494, %v493
        %v504 = vpack.c.b16 %v496, %v495
        %513 = vmatprep.subr.bf16.mxu0 0
        %514 = vmatpush1.bf16.msra.mxu0 %v497
        %515 = vmatprep.subr.bf16.mxu0 0
        %516 = vmatpush1.bf16.msra.mxu0 %v498
        %517 = vmatprep.subr.bf16.mxu0 0
        %518 = vmatpush1.bf16.msra.mxu0 %v499
        %519 = vmatprep.subr.bf16.mxu0 0
        %520 = vmatpush1.bf16.msra.mxu0 %v500
        %521 = vmatprep.subr.bf16.mxu0 0
        %522 = vmatpush1.bf16.msra.mxu0 %v501
        %523 = vmatprep.subr.bf16.mxu0 0
        %524 = vmatpush1.bf16.msra.mxu0 %v502
        %525 = vmatprep.subr.bf16.mxu0 0
        %526 = vmatpush1.bf16.msra.mxu0 %v503
        %527 = vmatprep.subr.bf16.mxu0 0
        %528 = vmatpush1.bf16.msra.mxu0 %v504
        %529 = vmatprep.subr.bf16.mxu0 0
        %530 = vmatpush1.bf16.msra.mxu0 0
        %531 = vmatprep.subr.bf16.mxu0 0
        %532 = vmatpush1.bf16.msra.mxu0 0
        %533 = vmatprep.subr.bf16.mxu0 0
        %534 = vmatpush1.bf16.msra.mxu0 0
        %535 = vmatprep.subr.bf16.mxu0 0
        %536 = vmatpush1.bf16.msra.mxu0 0
        %537 = vmatprep.subr.bf16.mxu0 0
        %538 = vmatpush1.bf16.msra.mxu0 0
        %539 = vmatprep.subr.bf16.mxu0 0
        %540 = vmatpush1.bf16.msra.mxu0 0
        %541 = vmatprep.subr.bf16.mxu0 0
        %542 = vmatpush1.bf16.msra.mxu0 0
        %543 = vmatprep.subr.bf16.mxu0 0
        %544 = vmatpush1.bf16.msra.mxu0 0
        %545 = vmatprep.mubr.bf16.mxu0 0
        %546 = vmatmul.mubr.bf16.gmra.mrb[0].mxu0 %v443
        %v547 = vpop.f32.mrb[0].mxu0
        %v548 = vadd.f32 %v464, %v547
        %v549 = vpop.f32.mrb[0].mxu0
        %v550 = vpop.f32.mrb[0].mxu0
        %v551 = vadd.f32 %v464, %v550
        %v552 = vpop.f32.mrb[0].mxu0
        %553 = vmatprep.mubr.bf16.mxu0 0
        %554 = vmatmul.mubr.bf16.gmra.mrb[0].mxu0 %v444
        %v555 = vpop.f32.mrb[0].mxu0
        %v556 = vadd.f32 %v464, %v555
        %v557 = vpop.f32.mrb[0].mxu0
        %v558 = vpop.f32.mrb[0].mxu0
        %v559 = vadd.f32 %v464, %v558
        %v560 = vpop.f32.mrb[0].mxu0
        %561 = vdwg.mxu0
        %v562 = vmax.f32 %v548, 0.0
        %v563 = vmax.f32 %v551, 0.0
        %v564 = vmax.f32 %v556, 0.0
        %v565 = vmax.f32 %v559, 0.0
        %v566 = vpack.c.bf16 %v563, %v562
        %v567 = vpack.c.bf16 %v565, %v564
        %v568 = vld [vmem:[#allocation2 + $0x88] sm:$0xf]
        %v569 = vld [vmem:[#allocation2 + $0x8c] sm:$0xf]
        %v570 = vld [vmem:[#allocation2 + $0x90] sm:$0xf]
        %v571 = vld [vmem:[#allocation2 + $0x94] sm:$0xf]
        %v572 = vld [vmem:[#allocation2 + $0x98] sm:$0xf]
        %v573 = vld [vmem:[#allocation2 + $0x9c] sm:$0xf]
        %v574 = vld [vmem:[#allocation2 + $0xa0] sm:$0xf]
        %v575 = vld [vmem:[#allocation2 + $0xa4] sm:$0xf]
        %v576 = vld [vmem:[#allocation2 + $0xa8] sm:$0xf]
        %v577 = vld [vmem:[#allocation2 + $0xac] sm:$0xf]
        %v578 = vld [vmem:[#allocation2 + $0xb0] sm:$0xf]
        %v579 = vld [vmem:[#allocation2 + $0xb4] sm:$0xf]
        %v580 = vld [vmem:[#allocation2 + $0xb8] sm:$0xf]
        %v581 = vld [vmem:[#allocation2 + $0xbc] sm:$0xf]
        %v582 = vld [vmem:[#allocation2 + $0xc0] sm:$0xf]
        %v583 = vld [vmem:[#allocation2 + $0xc4] sm:$0xf]
        %v584 = vlaneseq
        %v585 = vshrl.u32 %v584, 7
        %v586 = vsub.s32 0, %v585
        %v587 = vrot.slane %v193, %v586
        %v604 = vunpack.c.l.b16 %v568
        %v605 = vunpack.c.l.b16 %v569
        %v606 = vunpack.c.l.b16 %v570
        %v607 = vunpack.c.l.b16 %v571
        %v608 = vunpack.c.l.b16 %v572
        %v609 = vunpack.c.l.b16 %v573
        %v610 = vunpack.c.l.b16 %v574
        %v611 = vunpack.c.l.b16 %v575
        %v612 = vunpack.c.l.b16 %v576
        %v613 = vunpack.c.l.b16 %v577
        %v614 = vunpack.c.l.b16 %v578
        %v615 = vunpack.c.l.b16 %v579
        %v616 = vunpack.c.l.b16 %v580
        %v617 = vunpack.c.l.b16 %v581
        %v618 = vunpack.c.l.b16 %v582
        %v619 = vunpack.c.l.b16 %v583
        %v620 = vpack.c.b16 %v605, %v604
        %v621 = vpack.c.b16 %v607, %v606
        %v622 = vpack.c.b16 %v609, %v608
        %v623 = vpack.c.b16 %v611, %v610
        %v624 = vpack.c.b16 %v613, %v612
        %v625 = vpack.c.b16 %v615, %v614
        %v626 = vpack.c.b16 %v617, %v616
        %v627 = vpack.c.b16 %v619, %v618
        %636 = vmatprep.subr.bf16.mxu0 0
        %637 = vmatpush1.bf16.msra.mxu0 %v620
        %638 = vmatprep.subr.bf16.mxu0 0
        %639 = vmatpush1.bf16.msra.mxu0 %v621
        %640 = vmatprep.subr.bf16.mxu0 0
        %641 = vmatpush1.bf16.msra.mxu0 %v622
        %642 = vmatprep.subr.bf16.mxu0 0
        %643 = vmatpush1.bf16.msra.mxu0 %v623
        %644 = vmatprep.subr.bf16.mxu0 0
        %645 = vmatpush1.bf16.msra.mxu0 %v624
        %646 = vmatprep.subr.bf16.mxu0 0
        %647 = vmatpush1.bf16.msra.mxu0 %v625
        %648 = vmatprep.subr.bf16.mxu0 0
        %649 = vmatpush1.bf16.msra.mxu0 %v626
        %650 = vmatprep.subr.bf16.mxu0 0
        %651 = vmatpush1.bf16.msra.mxu0 %v627
        %652 = vmatprep.subr.bf16.mxu0 0
        %653 = vmatpush1.bf16.msra.mxu0 0
        %654 = vmatprep.subr.bf16.mxu0 0
        %655 = vmatpush1.bf16.msra.mxu0 0
        %656 = vmatprep.subr.bf16.mxu0 0
        %657 = vmatpush1.bf16.msra.mxu0 0
        %658 = vmatprep.subr.bf16.mxu0 0
        %659 = vmatpush1.bf16.msra.mxu0 0
        %660 = vmatprep.subr.bf16.mxu0 0
        %661 = vmatpush1.bf16.msra.mxu0 0
        %662 = vmatprep.subr.bf16.mxu0 0
        %663 = vmatpush1.bf16.msra.mxu0 0
        %664 = vmatprep.subr.bf16.mxu0 0
        %665 = vmatpush1.bf16.msra.mxu0 0
        %666 = vmatprep.subr.bf16.mxu0 0
        %667 = vmatpush1.bf16.msra.mxu0 0
        %668 = vmatprep.mubr.bf16.mxu0 0
        %669 = vmatmul.mubr.bf16.gmra.mrb[0].mxu0 %v566
        %v670 = vpop.f32.mrb[0].mxu0
        %v671 = vadd.f32 %v587, %v670
        %v672 = vpop.f32.mrb[0].mxu0
        %v673 = vpop.f32.mrb[0].mxu0
        %v674 = vadd.f32 %v587, %v673
        %v675 = vpop.f32.mrb[0].mxu0
        %676 = vmatprep.mubr.bf16.mxu0 0
        %677 = vmatmul.mubr.bf16.gmra.mrb[0].mxu0 %v567
        %v678 = vpop.f32.mrb[0].mxu0
        %v679 = vadd.f32 %v587, %v678
        %v680 = vpop.f32.mrb[0].mxu0
        %v681 = vpop.f32.mrb[0].mxu0
        %v682 = vadd.f32 %v587, %v681
        %v683 = vpop.f32.mrb[0].mxu0
        %684 = vdwg.mxu0
        %v685 = vadd.f32 %v439, %v671
        %v686 = vadd.f32 %v440, %v674
        %v687 = vadd.f32 %v441, %v679
        %v688 = vadd.f32 %v442, %v682
        %689 = vst [vmem:[%s179] sm:$0xff] %v685
        %690 = vst [vmem:[%s179 + $0x8] sm:$0xff] %v686
        %691 = vst [vmem:[%s179 + $0x10] sm:$0xff] %v687
        %692 = vst [vmem:[%s179 + $0x18] sm:$0xff] %v688
        %s693 = sand.u32 %s94, 1
        %s694 = scalar_lea.sflag [#allocation4], %s693
        %s695 = sand.u32 %s94, 1
        %s696 = smul.addr %s695, 32
        %s697 = scalar_lea.vmem [#allocation5], %s696
        // Predicated region
        $region37: #{tpu_custom_call.1} parent=31 // pred_check
          %p698 = pneg %p104
        $region38: #{tpu_custom_call.1} parent=31 // pred_check_branch
          %700 = sbr.rel (%p698) target = $region40
        $region39: #{tpu_custom_call.1} parent=31 // pred_region
          %s701 = smul.u32 4, %s18
          %s703 = ssub.s32 512, 512
          %704 = vsyncadd %s694, %s703
          %s705 = smul.addr %s701, 128
          %s706 = scalar_lea.hbm %s3, %s705
          %s707 = sshll.u32 %s697, 4
          %s708 = int_to_ptr.vmem [resolvable:$true] %s707
          %713 = dma.vmem_to_hbm [thread:$0]  %s708, 512, %s706, %s694, 128, 128, 8
        $region40: #{tpu_custom_call.1} parent=31 // pred_fallthru
          _
      $region32: #{tpu_custom_call.1} parent=5 // pred_fallthru
        _
      %p714 = scmp.le.s32.totalorder 2, %s13
      // Predicated region
      $region41: #{tpu_custom_call.1} parent=5 // pred_check
        %p715 = pneg %p714
      $region42: #{tpu_custom_call.1} parent=5 // pred_check_branch
        %717 = sbr.rel (%p715) target = $region44
      $region43: #{tpu_custom_call.1} parent=5 // pred_region
        %s718 = ssub.s32 %s13, 2
        // Predicated region
        $region45: #{tpu_custom_call.1} parent=43 // pred_check
          %p719 = pneg %p110
        $region46: #{tpu_custom_call.1} parent=43 // pred_check_branch
          %721 = sbr.rel (%p719) target = $region48
        $region47: #{tpu_custom_call.1} parent=43 // pred_region
          %s722 = sand.u32 %s95, 1
          %s723 = scalar_lea.sflag [#allocation4], %s722
          %s724 = sand.u32 %s95, 1
          %s725 = smul.addr %s724, 32
          %s726 = scalar_lea.vmem [#allocation5], %s725
          %727 = dma.done %s723, 512
        $region48: #{tpu_custom_call.1} parent=43 // pred_fallthru
          _
      $region44: #{tpu_custom_call.1} parent=5 // pred_fallthru
        _
    $region6: #{tpu_custom_call.1} parent=1 // loop_footer
      %s17 = sadd.s32 1, %s13
    $region7: #{tpu_custom_call.1} parent=1 // loop_footer_branch
      %12 = sbr.rel target = $region3
    $region8: #{tpu_custom_call.1} parent=1 // loop_exit
      _
    %728 = vsyncpa [#allocation3], 1
    %s729 = scalar_lea.sflag [#allocation3], 1
    %730 = vsyncpa %s729, 1
    %731 = vsyncpa [#allocation4], 1
    %s732 = scalar_lea.sflag [#allocation4], 1
    %733 = vsyncpa %s732, 1

</llo_original>
